<compile_context>
chip_gen: v7x
topology: tpu7x:2x2x1
jax: 0.10.0
libtpu: 0.0.40
codegen_flags: <defaults>
</compile_context>

<pallas_src>
import numpy as np
import jax
import jax.numpy as jnp
from jax.experimental import pallas as pl
from jax.experimental.pallas import tpu as pltpu


def build_position_encoding_body(d_model, max_seq_len):
    """Sinusoid table rows for positions 0..max_seq_len-1 (no pad row).

    Row s equals PyTorch's embedding weight row s+1; the pad row (index 0,
    all zeros) is reproduced in-kernel via the validity mask."""
    pe = np.array(
        [[pos / np.power(10000, 2.0 * (j // 2) / d_model) for j in range(d_model)]
         for pos in range(max_seq_len)], dtype=np.float64)
    pe[:, 0::2] = np.sin(pe[:, 0::2])
    pe[:, 1::2] = np.cos(pe[:, 1::2])
    return jnp.asarray(pe.astype(np.float32))                  # [max_seq_len, D]


def _pos_encoding_kernel(len_ref, pe_ref, emb_ref):
    # len_ref: [B] int32 in SMEM (scalar prefetch)
    # pe_ref : [TS, D] f32  (table rows for positions s_tile_start .. +TS)
    # emb_ref: [TS, D] f32  (output tile for batch b, S-tile si)
    si = pl.program_id(0)
    b = pl.program_id(1)
    TS, _ = pe_ref.shape

    length = len_ref[b]                                          # scalar (SMEM)
    s_abs = si * TS + jax.lax.broadcasted_iota(jnp.int32, (TS, 1), 0)
    valid = s_abs < length                                       # [TS, 1]
    emb_ref[...] = jnp.where(valid, pe_ref[...], 0.0).astype(emb_ref.dtype)


def _choose_s_tile(S, D, target_bytes=2 << 20):
    # ~2 MiB f32 output tile: big enough to amortize per-step overhead,
    # small enough (x double-buffering) for v7x's 32 MiB scoped VMEM default.
    ts = max(8, ((target_bytes // (D * 4)) // 8) * 8)
    return S if S <= ts else ts


def positional_encoding_forward(pe_body, input_len, seq_len):
    """Returns (pos_embeddings [B, seq_len, D], pos [B, seq_len]).

    `seq_len` is static and should equal max(input_len) to match the PyTorch
    forward (which sizes the output by torch.max(input_len))."""
    B = int(input_len.shape[0])
    S = int(seq_len)
    D = int(pe_body.shape[1])
    assert pe_body.shape[0] >= S, "seq_len exceeds positional table length"

    lens = input_len.astype(jnp.int32)                           # [B]
    pe_body = jax.lax.slice(pe_body, (0, 0), (S, D)) if pe_body.shape[0] != S else pe_body

    TS = _choose_s_tile(S, D)
    num_s_tiles = pl.cdiv(S, TS)

    emb = pl.pallas_call(
        _pos_encoding_kernel,
        out_shape=jax.ShapeDtypeStruct((B, S, D), jnp.float32),
        grid_spec=pltpu.PrefetchScalarGridSpec(
            num_scalar_prefetch=1,
            grid=(num_s_tiles, B),                               # B innermost
            in_specs=[
                # pe tile: constant in b -> DMA'd once per S-tile, reused across batch
                pl.BlockSpec((TS, D), lambda si, b, lens: (si, 0)),
            ],
            out_specs=pl.BlockSpec((None, TS, D), lambda si, b, lens: (b, si, 0)),
        ),
        compiler_params=pltpu.CompilerParams(
            dimension_semantics=("parallel", "parallel")),
    )(lens, pe_body)

    # pos is tiny ([B, S] int32); a trivial iota/where in the wrapper fuses for
    # free in XLA and avoids lane-sparse (S < 128) masked stores in-kernel.
    s_idx = jnp.arange(S, dtype=jnp.int32)
    pos = jnp.where(s_idx[None, :] < lens[:, None], s_idx[None, :] + 1, 0)
    return emb, pos


if __name__ == "__main__":
    d_model = 256
    max_seq_len = 8
    B = 2

    pe_body = build_position_encoding_body(d_model, max_seq_len)   # [S, D]

    # deterministic inputs; first length pinned to max_seq_len so that the
    # static seq_len matches torch.max(input_len) in the reference forward.
    key = jax.random.PRNGKey(0)
    rand_len = jax.random.randint(key, (B - 1,), 1, max_seq_len + 1, dtype=jnp.int32)
    input_len = jnp.concatenate(
        [jnp.array([max_seq_len], dtype=jnp.int32), rand_len])
    seq_len = max_seq_len  # static stand-in for max(input_len)

    fwd = jax.jit(positional_encoding_forward, static_argnums=(2,))
    emb, pos = fwd(pe_body, input_len, seq_len)
    emb, pos = jax.block_until_ready((emb, pos))

    # ---- numpy reference mirroring the PyTorch forward exactly ----
    pe_np = np.concatenate(
        [np.zeros((1, d_model), dtype=np.float32), np.asarray(pe_body)], axis=0)
    lens_np = np.asarray(input_len)
    pos_ref = np.zeros((B, seq_len), dtype=np.int64)
    for b, L in enumerate(lens_np):
        pos_ref[b, :int(L)] = np.arange(1, int(L) + 1)
    emb_ref = pe_np[pos_ref]

    assert emb.shape == (B, seq_len, d_model)
    assert pos.shape == (B, seq_len)
    np.testing.assert_array_equal(np.asarray(pos), pos_ref.astype(np.int32))
    np.testing.assert_allclose(np.asarray(emb), emb_ref, rtol=1e-6, atol=1e-6)
    assert bool(jnp.all(jnp.isfinite(emb)))
    print("KERNEL_OK")
</pallas_src>

<mosaic_0001>
module attributes {stable_mosaic.version = 11 : i64} {
  func.func @_pos_encoding_kernel(%arg0: i32, %arg1: i32, %arg2: memref<2xi32, #tpu.memory_space<smem>>, %arg3: memref<8x256xf32, #tpu.memory_space<vmem>>, %arg4: memref<1x8x256xf32, #tpu.memory_space<vmem>>) attributes {dimension_semantics = [#tpu.dimension_semantics<parallel>, #tpu.dimension_semantics<parallel>], iteration_bounds = array<i64: 1, 2>, scalar_prefetch = 1 : i64, scratch_operands = 0 : i64, tpu.core_type = #tpu.core_type<tc>, window_params = [{transform_indices = @transform_0, window_bounds = array<i64: 8, 256>}, {transform_indices = @transform_1, window_bounds = array<i64: 1, 8, 256>}]} {
    %0 = arith.index_cast %arg1 : i32 to index
    %1 = memref.load %arg2[%0] : memref<2xi32, #tpu.memory_space<smem>>
    %c8_i32 = arith.constant 8 : i32
    %2 = arith.muli %arg0, %c8_i32 : i32
    %3 = tpu.iota {dimensions = array<i32: 0>} : vector<8x1xi32>
    %4 = vector.broadcast %2 : i32 to vector<8x1xi32>
    %5 = arith.addi %4, %3 : vector<8x1xi32>
    %6 = vector.broadcast %1 : i32 to vector<8x1xi32>
    %7 = arith.cmpi slt, %5, %6 : vector<8x1xi32>
    %c0 = arith.constant 0 : index
    %c0_0 = arith.constant 0 : index
    %8 = vector.load %arg3[%c0, %c0_0] : memref<8x256xf32, #tpu.memory_space<vmem>>, vector<8x256xf32>
    %cst = arith.constant 0.000000e+00 : f32
    %9 = vector.shape_cast %7 : vector<8x1xi1> to vector<8x1xi1>
    %10 = vector.broadcast %9 : vector<8x1xi1> to vector<8x256xi1>
    %11 = vector.broadcast %cst : f32 to vector<8x256xf32>
    %12 = arith.select %10, %8, %11 : vector<8x256xi1>, vector<8x256xf32>
    %c0_1 = arith.constant 0 : index
    %c0_2 = arith.constant 0 : index
    %c0_3 = arith.constant 0 : index
    %13 = vector.load %arg4[%c0_1, %c0_2, %c0_3] : memref<1x8x256xf32, #tpu.memory_space<vmem>>, vector<1x8x256xf32>
    %14 = vector.shape_cast %13 : vector<1x8x256xf32> to vector<8x256xf32>
    %15 = vector.shape_cast %12 : vector<8x256xf32> to vector<1x8x256xf32>
    tpu.vector_store %arg4[%c0_1, %c0_2, %c0_3], %15 {strides = array<i32>} : memref<1x8x256xf32, #tpu.memory_space<vmem>>, vector<1x8x256xf32>,
    return
  }
  func.func @transform_0(%arg0: i32, %arg1: i32, %arg2: memref<2xi32, #tpu.memory_space<smem>>) -> (i32, i32) {
    %c0_i32 = arith.constant 0 : i32
    %c0_i32_0 = arith.constant 0 : i32
    return %arg0, %c0_i32 : i32, i32
  }
  func.func @transform_1(%arg0: i32, %arg1: i32, %arg2: memref<2xi32, #tpu.memory_space<smem>>) -> (i32, i32, i32) {
    %c0_i32 = arith.constant 0 : i32
    %c0_i32_0 = arith.constant 0 : i32
    return %arg1, %arg0, %c0_i32 : i32, i32, i32
  }
}

</mosaic_0001>

<llo_original>
// kernel: positional_encoding_forward.1
$region0: #{positional_encoding_forward.1}
  #allocation0 [shape = 'u32[]', space=smem, size = 0x4, offset = 0x4, fixed_abs, tag = 'smem constant byte address 0x4 - core index']
  #allocation1 [shape = 'u32[144,128]{1,0:T(1,128)}', space=vmem, size = 0x12000, scoped, tag = 'internal scratch']
  #allocation2 [shape = 's32[1]{0}', space=sflag, size = 0x4, scoped, tag = 'scoped memory for positional_encoding_forward.1']
  #allocation3 [shape = 'u8[512]{0}', space=smem, size = 0x200, scoped, tag = 'prefetched SMEM operand 0']
  %s0 = inlined_call_operand.vmem [shape: s32[2], index: 0, kind: input, shape index: {}]
  %s1 = inlined_call_operand.hbm [shape: f32[8,256], index: 1, kind: input, shape index: {}]
  %s2 = inlined_call_operand.hbm [shape: f32[2,8,256], index: 2, kind: output, shape index: {}]
  %s3 = sld [smem:[#allocation0]]
  $region41: #{positional_encoding_forward.1} parent=0
    _
  %s5 = ssub.s32 1, %s3
  %s6 = scalar_select 0, %s5, %s3
  %s7 = sshll.u32 %s0, 4
  %s8 = int_to_ptr.vmem [resolvable:$true] %s7
  %10 = dma.vmem_to_smem %s8, 16, [#allocation3], [#allocation2]
  %11 = dma.done [#allocation2], 16
  %12 = sfence
  $region1: #{positional_encoding_forward.1} parent=0
    #allocation4 [shape = 'u8[8192]{0}', space=vmem, size = 0x2000, scoped, tag = 'input window, operand 1, single buffered']
    #allocation5 [shape = 's32[2]{0}', space=sflag, size = 0x8, scoped, tag = 'scoped memory for positional_encoding_forward.1']
    #allocation6 [shape = 's32[2]{0}', space=sflag, size = 0x8, scoped, tag = 'scoped memory for positional_encoding_forward.1']
    #allocation7 [shape = 'u8[16384]{0}', space=vmem, size = 0x4000, scoped, tag = 'output window, operand 0']
    %13 = vsyncpa [#allocation5], 0
    %14 = vsyncpa [#allocation6], 0
    %s15 = scalar_lea.sflag [#allocation6], 1
    %16 = vsyncpa %s15, 0
    loop: start=0, step=1, limit=4
    $region2: #{positional_encoding_forward.1} parent=1 // loop_pre_header
      _
    $region3: #{positional_encoding_forward.1} parent=1 // loop_header
      %s18 = sphi 0, %s22
      %p19 = scmp.ge.s32.totalorder %s18, 4
      %s25 = sphi 0, %s37
      %s26 = sphi 0, %s33
      %s27 = sphi 0, %s25
      %s28 = sphi 0, %s26
      %s29 = sphi 0, %s27
      %s30 = sphi 0, %s28
      %s40 = sphi 0, %s42
      %s43 = sphi 0, %s40
      %s44 = sphi 0, %s43
      %s60 = sphi 0, %s44
      %s68 = sphi 0, %s70
      %s71 = sphi 0, %s68
      %s72 = sphi 0, %s71
      %s88 = sphi 0, %s72
    $region4: #{positional_encoding_forward.1} parent=1 // loop_header_branch
      %21 = sbr.rel (%p19) target = $region8
    $region5: #{positional_encoding_forward.1} parent=1 // loop_body
      %s23 = ssub.s32 %s18, 1
      %s24 = ssub.s32 %s18, 2
      %s31 = sadd.s32 1, %s26
      %p32 = scmp.ge.s32.totalorder %s31, 2
      %s33 = scalar_select %p32, 0, %s31
      %s34 = sadd.s32 1, %s25
      %s35 = scalar_select %p32, %s34, %s25
      %p36 = scmp.ge.s32.totalorder %s35, 1
      %s37 = scalar_select %p36, 0, %s35
      %s38 = ssub.s32 %s25, %s37
      %p39 = scmp.eq.s32.totalorder %s38, 0
      %s41 = sadd.s32 %s40, 1
      %s42 = scalar_select %p39, %s40, %s41
      %p45 = pneg %p39
      %p46 = scmp.eq.s32.totalorder %s18, 1
      %p47 = por %p45, %p46
      %p48 = scmp.ne.s32.totalorder %s40, %s43
      %p49 = scmp.eq.s32.totalorder %s18, 0
      %p50 = por %p48, %p49
      %p51 = scmp.ne.s32.totalorder %s40, %s43
      %p52 = scmp.eq.s32.totalorder %s23, 1
      %p53 = por %p51, %p52
      %p54 = scmp.ne.s32.totalorder %s43, %s44
      %p55 = scmp.eq.s32.totalorder %s23, 0
      %p56 = por %p54, %p55
      %p57 = scmp.ne.s32.totalorder %s43, %s44
      %p58 = scmp.eq.s32.totalorder %s24, 1
      %p59 = por %p57, %p58
      %p61 = scmp.ne.s32.totalorder %s44, %s60
      %p62 = scmp.eq.s32.totalorder %s24, 0
      %p63 = por %p61, %p62
      %s64 = ssub.s32 %s26, %s33
      %s65 = ssub.s32 %s25, %s37
      %s66 = sor.u32 %s64, %s65
      %p67 = scmp.eq.s32.totalorder %s66, 0
      %s69 = sadd.s32 %s68, 1
      %s70 = scalar_select %p67, %s68, %s69
      %p73 = pneg %p67
      %p74 = scmp.eq.s32.totalorder %s18, 1
      %p75 = por %p73, %p74
      %p76 = scmp.ne.s32.totalorder %s68, %s71
      %p77 = scmp.eq.s32.totalorder %s18, 0
      %p78 = por %p76, %p77
      %p79 = scmp.ne.s32.totalorder %s68, %s71
      %p80 = scmp.eq.s32.totalorder %s23, 1
      %p81 = por %p79, %p80
      %p82 = scmp.ne.s32.totalorder %s71, %s72
      %p83 = scmp.eq.s32.totalorder %s23, 0
      %p84 = por %p82, %p83
      %p85 = scmp.ne.s32.totalorder %s71, %s72
      %p86 = scmp.eq.s32.totalorder %s24, 1
      %p87 = por %p85, %p86
      %p89 = scmp.ne.s32.totalorder %s72, %s88
      %p90 = scmp.eq.s32.totalorder %s24, 0
      %p91 = por %p89, %p90
      %p92 = scmp.le.s32.totalorder 1, %s18
      %p93 = scmp.lt.s32.totalorder %s18, 3
      %p94 = pnand %p92, %p93
      %p95 = pneg %p94
      // Predicated region
      $region9: #{positional_encoding_forward.1} parent=5 // pred_check
        _
      $region10: #{positional_encoding_forward.1} parent=5 // pred_check_branch
        %97 = sbr.rel (%p94) target = $region12
      $region11: #{positional_encoding_forward.1} parent=5 // pred_region
        %s98 = ssub.s32 %s18, 1
        // Predicated region
        $region13: #{positional_encoding_forward.1} parent=11 // pred_check
          %p99 = pneg %p56
        $region14: #{positional_encoding_forward.1} parent=11 // pred_check_branch
          %101 = sbr.rel (%p99) target = $region16
        $region15: #{positional_encoding_forward.1} parent=11 // pred_region
          %s103 = ssub.s32 256, 256
          %104 = vsyncadd [#allocation5], %s103
          %s105 = smul.addr %s27, 2
          %s106 = smul.addr %s105, 128
          %s107 = scalar_lea.hbm %s1, %s106
          %s109 = sshll.u32 [#allocation4], 4
          %s110 = int_to_ptr.vmem [resolvable:$true] %s109
          %112 = dma.hbm_to_vmem [thread:$0]  %s107, 256, %s110, [#allocation5]
        $region16: #{positional_encoding_forward.1} parent=11 // pred_fallthru
          _
      $region12: #{positional_encoding_forward.1} parent=5 // pred_fallthru
        _
      %p113 = scmp.lt.s32.totalorder %s18, 2
      // Predicated region
      $region17: #{positional_encoding_forward.1} parent=5 // pred_check
        %p114 = pneg %p113
      $region18: #{positional_encoding_forward.1} parent=5 // pred_check_branch
        %116 = sbr.rel (%p114) target = $region20
      $region19: #{positional_encoding_forward.1} parent=5 // pred_region
        _
      $region20: #{positional_encoding_forward.1} parent=5 // pred_fallthru
        _
      %p117 = scmp.le.s32.totalorder 1, %s18
      %p118 = scmp.lt.s32.totalorder %s18, 3
      %p119 = pnand %p117, %p118
      %p120 = pneg %p119
      // Predicated region
      $region21: #{positional_encoding_forward.1} parent=5 // pred_check
        _
      $region22: #{positional_encoding_forward.1} parent=5 // pred_check_branch
        %122 = sbr.rel (%p119) target = $region24
      $region23: #{positional_encoding_forward.1} parent=5 // pred_region
        %s123 = ssub.s32 %s18, 1
        // Predicated region
        $region25: #{positional_encoding_forward.1} parent=23 // pred_check
          %p124 = pneg %p56
        $region26: #{positional_encoding_forward.1} parent=23 // pred_check_branch
          %126 = sbr.rel (%p124) target = $region28
        $region27: #{positional_encoding_forward.1} parent=23 // pred_region
          %127 = dma.done [#allocation5], 256
        $region28: #{positional_encoding_forward.1} parent=23 // pred_fallthru
          _
        %p128 = pneg %p56
        %p129 = pneg %p53
        %p130 = pneg %p84
        %p131 = pneg %p81
        %s132 = sand.u32 %s71, 1
        %s133 = scalar_lea.sflag [#allocation6], %s132
        %s134 = sand.u32 %s71, 1
        %s135 = smul.addr %s134, 16
        %s136 = scalar_lea.vmem [#allocation7], %s135
        %s137 = sld [smem:[#allocation3 + %s28]]
        %s138 = smul.u32 %s27, 8
        %v139 = vlaneseq
        %v140 = vshrl.u32 %v139, 7
        %v141 = vstv %s138
        %v142 = vadd.s32 %v141, %v140
        %v143 = vstv %s137
        %vm144 = vcmp.lt.s32.totalorder %v142, %v143
        %v145 = vld [vmem:[#allocation4] sm:$0xff]
        %v146 = vld [vmem:[#allocation4 + $0x8] sm:$0xff]
        %v147 = vsel %vm144, 1, 0
        %vm148 = vcmp.eq.s32.totalorder %v147, 1
        %v149 = vsel %vm148, %v145, 0.0
        %v150 = vsel %vm148, %v146, 0.0
        %151 = vst [vmem:[%s136] sm:$0xff] %v149
        %152 = vst [vmem:[%s136 + $0x8] sm:$0xff] %v150
        %s153 = sand.u32 %s71, 1
        %s154 = scalar_lea.sflag [#allocation6], %s153
        %s155 = sand.u32 %s71, 1
        %s156 = smul.addr %s155, 16
        %s157 = scalar_lea.vmem [#allocation7], %s156
        // Predicated region
        $region29: #{positional_encoding_forward.1} parent=23 // pred_check
          %p158 = pneg %p81
        $region30: #{positional_encoding_forward.1} parent=23 // pred_check_branch
          %160 = sbr.rel (%p158) target = $region32
        $region31: #{positional_encoding_forward.1} parent=23 // pred_region
          %s162 = ssub.s32 256, 256
          %163 = vsyncadd %s154, %s162
          %s164 = smul.addr %s27, 2
          %s165 = smul.addr %s28, 2
          %s166 = sadd.s32 %s164, %s165
          %s167 = smul.addr %s166, 128
          %s168 = scalar_lea.hbm %s2, %s167
          %s170 = sshll.u32 %s157, 4
          %s171 = int_to_ptr.vmem [resolvable:$true] %s170
          %173 = dma.vmem_to_hbm [thread:$0]  %s171, 256, %s168, %s154
        $region32: #{positional_encoding_forward.1} parent=23 // pred_fallthru
          _
      $region24: #{positional_encoding_forward.1} parent=5 // pred_fallthru
        _
      %p174 = scmp.le.s32.totalorder 2, %s18
      // Predicated region
      $region33: #{positional_encoding_forward.1} parent=5 // pred_check
        %p175 = pneg %p174
      $region34: #{positional_encoding_forward.1} parent=5 // pred_check_branch
        %177 = sbr.rel (%p175) target = $region36
      $region35: #{positional_encoding_forward.1} parent=5 // pred_region
        %s178 = ssub.s32 %s18, 2
        // Predicated region
        $region37: #{positional_encoding_forward.1} parent=35 // pred_check
          %p179 = pneg %p87
        $region38: #{positional_encoding_forward.1} parent=35 // pred_check_branch
          %181 = sbr.rel (%p179) target = $region40
        $region39: #{positional_encoding_forward.1} parent=35 // pred_region
          %s182 = sand.u32 %s72, 1
          %s183 = scalar_lea.sflag [#allocation6], %s182
          %s184 = sand.u32 %s72, 1
          %s185 = smul.addr %s184, 16
          %s186 = scalar_lea.vmem [#allocation7], %s185
          %187 = dma.done %s183, 256
        $region40: #{positional_encoding_forward.1} parent=35 // pred_fallthru
          _
      $region36: #{positional_encoding_forward.1} parent=5 // pred_fallthru
        _
    $region6: #{positional_encoding_forward.1} parent=1 // loop_footer
      %s22 = sadd.s32 1, %s18
    $region7: #{positional_encoding_forward.1} parent=1 // loop_footer_branch
      %17 = sbr.rel target = $region3
    $region8: #{positional_encoding_forward.1} parent=1 // loop_exit
      _
    %188 = vsyncpa [#allocation5], 1
    %s189 = scalar_lea.sflag [#allocation5], 1
    %190 = vsyncpa %s189, 1
    %191 = vsyncpa [#allocation6], 1
    %s192 = scalar_lea.sflag [#allocation6], 1
    %193 = vsyncpa %s192, 1

</llo_original>
